<compile_context>
chip_gen: v7x
topology: tpu7x:2x2x1
jax: 0.10.0
libtpu: 0.0.40
codegen_flags: <defaults>
</compile_context>

<pallas_src>
import functools
import math

import jax
import jax.numpy as jnp
from jax.experimental import pallas as pl
from jax.experimental.pallas import tpu as pltpu


def _round_up(x, m):
    return ((x + m - 1) // m) * m


_MAX_TILE = 2048  # rows; keeps in-kernel f32 temporaries comfortably inside VMEM on all chips


def _pick_batch_tile(B):
    """Pick a batch tile: big (low per-step overhead), >=2 steps for big B (v7x
    megacore), and an exact divisor of B when possible (no host pad copy)."""
    B8 = _round_up(B, 8)
    if B8 <= 1024:
        return B8                                     # single small tile
    # Target ~B/2 so the parallel batch axis splits across 2 TensorCores, capped.
    target = min(_MAX_TILE, _round_up(pl.cdiv(B8, 2), 512))
    # Prefer an exact divisor of B near the target -> no padding copy at all.
    for tb in range(target, target // 2, -8):
        if B % tb == 0:
            return tb
    # Otherwise rebalance tiles so padding is at most a few rows.
    steps = pl.cdiv(B8, target)
    return _round_up(pl.cdiv(B8, steps), 8)


def ppo_fused_kernel(state_ref, w_ref, b_ref, out_ref, *, state_dim, hidden, action_dim):
    H2 = 2 * hidden  # 128: actor half in lanes 0..63, value half in lanes 64..127

    x = state_ref[...]  # [TB, S] f32

    # Static ref slices into the packed weight buffer (offsets 0, S, S+128 are 8-aligned).
    w1 = w_ref[0:state_dim, :]                        # [S, 128]  = [aw1 | vw1]
    w2 = w_ref[state_dim:state_dim + H2, :]           # [128,128] = block-diag(aw2, vw2)
    w3 = w_ref[state_dim + H2:state_dim + 2 * H2, :]  # [128,128] = [aw3 -> lanes 0..A-1 ; vw3 -> lane A]
    b1 = b_ref[0:1, :]
    b2 = b_ref[1:2, :]
    b3 = b_ref[2:3, :]

    h = jnp.maximum(jnp.dot(x, w1, preferred_element_type=jnp.float32) + b1, 0.0)
    h = jnp.maximum(jnp.dot(h, w2, preferred_element_type=jnp.float32) + b2, 0.0)
    y = jnp.dot(h, w3, preferred_element_type=jnp.float32) + b3   # [TB, 128]

    # Masked softmax over the actor lanes (0..A-1); lane A carries the value head output.
    lane = jax.lax.broadcasted_iota(jnp.int32, y.shape, 1)
    is_act = lane < action_dim
    logits = jnp.where(is_act, y, -jnp.inf)
    m = jnp.max(logits, axis=-1, keepdims=True)
    e = jnp.exp(logits - m)                      # exp(-inf) == 0 on non-actor lanes
    denom = jnp.sum(e, axis=-1, keepdims=True)
    r = pl.reciprocal(denom, approx=True)        # EUP vrcp
    r = r * (2.0 - denom * r)                    # one Newton step -> ~f32 accuracy
    probs = e * r

    # probs in lanes 0..A-1, value in lane A, zeros elsewhere; store only the
    # first OUT_W lanes -> 16x less HBM write traffic than the 128-lane slab.
    res = jnp.where(is_act, probs, y)
    out_ref[...] = res[:, : out_ref.shape[1]]


def pack_params(params, state_dim, action_dim, hidden=64):
    """Host-side (once): fuse actor/value weights into one lane-dense buffer."""
    H2 = 2 * hidden
    W1 = jnp.concatenate([params["aw1"], params["vw1"]], axis=1)            # [S, 128]
    W2 = jnp.zeros((H2, H2), jnp.float32)
    W2 = W2.at[:hidden, :hidden].set(params["aw2"])
    W2 = W2.at[hidden:, hidden:].set(params["vw2"])                         # block-diag
    W3 = jnp.zeros((H2, H2), jnp.float32)
    W3 = W3.at[:hidden, :action_dim].set(params["aw3"])
    W3 = W3.at[hidden:, action_dim:action_dim + 1].set(params["vw3"])
    w_all = jnp.concatenate([W1, W2, W3], axis=0)                           # [S+256, 128]

    b_all = jnp.zeros((3, H2), jnp.float32)
    b_all = b_all.at[0, :].set(jnp.concatenate([params["ab1"][0], params["vb1"][0]]))
    b_all = b_all.at[1, :].set(jnp.concatenate([params["ab2"][0], params["vb2"][0]]))
    b_all = b_all.at[2, :action_dim].set(params["ab3"][0])
    b_all = b_all.at[2, action_dim].set(params["vb3"][0, 0])
    return w_all, b_all


def ppo_forward(state, w_all, b_all, *, state_dim, action_dim, hidden=64):
    """Returns (action_probs [B, A], value [B, 1]) — same as PPO_Model.forward()."""
    B = state.shape[0]
    H2 = 2 * hidden
    OUT_W = max(8, _round_up(action_dim + 1, 8))   # narrow HBM output width
    assert OUT_W <= H2

    TB = _pick_batch_tile(B)
    Bp = pl.cdiv(B, TB) * TB
    if Bp != B:
        state = jnp.pad(state, ((0, Bp - B), (0, 0)))
    grid = (Bp // TB,)

    kernel = functools.partial(
        ppo_fused_kernel, state_dim=state_dim, hidden=hidden, action_dim=action_dim
    )

    out = pl.pallas_call(
        kernel,
        out_shape=jax.ShapeDtypeStruct((Bp, OUT_W), jnp.float32),
        grid=grid,
        in_specs=[
            pl.BlockSpec((TB, state_dim), lambda i: (i, 0)),   # batch-tiled state
            pl.BlockSpec(w_all.shape, lambda i: (0, 0)),       # packed weights (DMA'd once)
            pl.BlockSpec(b_all.shape, lambda i: (0, 0)),       # packed biases  (DMA'd once)
        ],
        out_specs=pl.BlockSpec((TB, OUT_W), lambda i: (i, 0)), # narrow output
        compiler_params=pltpu.CompilerParams(
            dimension_semantics=("parallel",),
        ),
    )(state, w_all, b_all)

    probs = out[:B, :action_dim]
    value = out[:B, action_dim:action_dim + 1]
    return probs, value


def kaiming_uniform(key, fan_in, fan_out):
    # kaiming_uniform_(mode='fan_in', nonlinearity='relu'): bound = sqrt(6 / fan_in)
    bound = math.sqrt(6.0 / fan_in)
    # Stored as [in, out] (transposed w.r.t. torch's [out, in]) so the kernel does x @ W.
    return jax.random.uniform(
        key, (fan_in, fan_out), dtype=jnp.float32, minval=-bound, maxval=bound
    )


def init_params(key, state_dim, action_dim, hidden=64):
    keys = jax.random.split(key, 6)
    bias = lambda n: jnp.full((1, n), 0.01, dtype=jnp.float32)  # nn.init.constant_(b, 0.01)
    return {
        # actor
        "aw1": kaiming_uniform(keys[0], state_dim, hidden), "ab1": bias(hidden),
        "aw2": kaiming_uniform(keys[1], hidden, hidden),    "ab2": bias(hidden),
        "aw3": kaiming_uniform(keys[2], hidden, action_dim), "ab3": bias(action_dim),
        # value
        "vw1": kaiming_uniform(keys[3], state_dim, hidden), "vb1": bias(hidden),
        "vw2": kaiming_uniform(keys[4], hidden, hidden),    "vb2": bias(hidden),
        "vw3": kaiming_uniform(keys[5], hidden, 1),         "vb3": bias(1),
    }


if __name__ == "__main__":
    key = jax.random.PRNGKey(0)
    k_params, k_state, k_big = jax.random.split(key, 3)

    state_dim = 16   # FrozenLake 4x4 one-hot state
    action_dim = 4
    hidden = 64

    params = init_params(k_params, state_dim, action_dim, hidden)
    w_all, b_all = pack_params(params, state_dim, action_dim, hidden)

    # Reference check (plain JAX, unfused per-head math).
    def ref(x, p):
        h = jnp.maximum(x @ p["aw1"] + p["ab1"], 0.0)
        h = jnp.maximum(h @ p["aw2"] + p["ab2"], 0.0)
        logits = h @ p["aw3"] + p["ab3"]
        pr = jax.nn.softmax(logits, axis=-1)
        v = jnp.maximum(x @ p["vw1"] + p["vb1"], 0.0)
        v = jnp.maximum(v @ p["vw2"] + p["vb2"], 0.0)
        v = v @ p["vw3"] + p["vb3"]
        return pr, v

    # --- small batch (single tile path) ---
    batch = 8
    state = jax.random.uniform(k_state, (batch, state_dim), dtype=jnp.float32)
    probs, value = ppo_forward(
        state, w_all, b_all, state_dim=state_dim, action_dim=action_dim, hidden=hidden
    )
    jax.block_until_ready((probs, value))
    rp, rv = ref(state, params)
    assert probs.shape == (batch, action_dim) and value.shape == (batch, 1)
    assert jnp.allclose(probs, rp, atol=2e-5), "actor mismatch (small batch)"
    assert jnp.allclose(value, rv, atol=2e-5), "value mismatch (small batch)"

    # --- larger rollout batch (multi-tile grid, divisor-tile / parallel path) ---
    B_big = 3000
    idx = jax.random.randint(k_big, (B_big,), 0, state_dim)
    state_big = jax.nn.one_hot(idx, state_dim, dtype=jnp.float32)
    pb, vb = ppo_forward(
        state_big, w_all, b_all, state_dim=state_dim, action_dim=action_dim, hidden=hidden
    )
    jax.block_until_ready((pb, vb))
    rpb, rvb = ref(state_big, params)
    assert pb.shape == (B_big, action_dim) and vb.shape == (B_big, 1)
    assert jnp.allclose(pb, rpb, atol=2e-5), "actor mismatch (big batch)"
    assert jnp.allclose(vb, rvb, atol=2e-5), "value mismatch (big batch)"

    print("KERNEL_OK")
</pallas_src>

<mosaic_0001>
module attributes {stable_mosaic.version = 11 : i64} {
  func.func @ppo_fused_kernel(%arg0: i32, %arg1: memref<8x16xf32, #tpu.memory_space<vmem>>, %arg2: memref<272x128xf32, #tpu.memory_space<vmem>>, %arg3: memref<3x128xf32, #tpu.memory_space<vmem>>, %arg4: memref<8x8xf32, #tpu.memory_space<vmem>>) attributes {dimension_semantics = [#tpu.dimension_semantics<parallel>], iteration_bounds = array<i64: 1>, scalar_prefetch = 0 : i64, scratch_operands = 0 : i64, tpu.core_type = #tpu.core_type<tc>, window_params = [{transform_indices = @transform_0, window_bounds = array<i64: 8, 16>}, {pipeline_mode = #tpu.pipeline_mode<synchronous>, transform_indices = @transform_1, window_bounds = array<i64: 272, 128>}, {pipeline_mode = #tpu.pipeline_mode<synchronous>, transform_indices = @transform_2, window_bounds = array<i64: 3, 128>}, {transform_indices = @transform_3, window_bounds = array<i64: 8, 8>}]} {
    %c0 = arith.constant 0 : index
    %c0_0 = arith.constant 0 : index
    %0 = vector.load %arg1[%c0, %c0_0] : memref<8x16xf32, #tpu.memory_space<vmem>>, vector<8x16xf32>
    %c0_1 = arith.constant 0 : index
    %c0_2 = arith.constant 0 : index
    %1 = vector.load %arg2[%c0_1, %c0_2] : memref<272x128xf32, #tpu.memory_space<vmem>>, vector<16x128xf32>
    %c16 = arith.constant 16 : index
    %c0_3 = arith.constant 0 : index
    %2 = vector.load %arg2[%c16, %c0_3] : memref<272x128xf32, #tpu.memory_space<vmem>>, vector<128x128xf32>
    %c144 = arith.constant 144 : index
    %c0_4 = arith.constant 0 : index
    %3 = vector.load %arg2[%c144, %c0_4] : memref<272x128xf32, #tpu.memory_space<vmem>>, vector<128x128xf32>
    %c0_5 = arith.constant 0 : index
    %c0_6 = arith.constant 0 : index
    %4 = vector.load %arg3[%c0_5, %c0_6] : memref<3x128xf32, #tpu.memory_space<vmem>>, vector<1x128xf32>
    %c1 = arith.constant 1 : index
    %c0_7 = arith.constant 0 : index
    %5 = vector.load %arg3[%c1, %c0_7] : memref<3x128xf32, #tpu.memory_space<vmem>>, vector<1x128xf32>
    %c2 = arith.constant 2 : index
    %c0_8 = arith.constant 0 : index
    %6 = vector.load %arg3[%c2, %c0_8] : memref<3x128xf32, #tpu.memory_space<vmem>>, vector<1x128xf32>
    %cst = arith.constant dense<0.000000e+00> : vector<8x128xf32>
    %7 = tpu.matmul %0, %1, %cst {dimension_numbers = #tpu.dot_dimension_numbers<[1], [0], [0], [1], [0, 0, 1, 1], [], []>} : vector<8x16xf32>, vector<16x128xf32>, vector<8x128xf32> -> vector<8x128xf32>
    %8 = vector.broadcast %4 : vector<1x128xf32> to vector<8x128xf32>
    %9 = arith.addf %7, %8 : vector<8x128xf32>
    %cst_9 = arith.constant 0.000000e+00 : f32
    %10 = vector.broadcast %cst_9 : f32 to vector<8x128xf32>
    %11 = arith.maximumf %9, %10 : vector<8x128xf32>
    %cst_10 = arith.constant dense<0.000000e+00> : vector<8x128xf32>
    %12 = tpu.matmul %11, %2, %cst_10 {dimension_numbers = #tpu.dot_dimension_numbers<[1], [0], [0], [1], [0, 0, 1, 1], [], []>} : vector<8x128xf32>, vector<128x128xf32>, vector<8x128xf32> -> vector<8x128xf32>
    %13 = vector.broadcast %5 : vector<1x128xf32> to vector<8x128xf32>
    %14 = arith.addf %12, %13 : vector<8x128xf32>
    %cst_11 = arith.constant 0.000000e+00 : f32
    %15 = vector.broadcast %cst_11 : f32 to vector<8x128xf32>
    %16 = arith.maximumf %14, %15 : vector<8x128xf32>
    %cst_12 = arith.constant dense<0.000000e+00> : vector<8x128xf32>
    %17 = tpu.matmul %16, %3, %cst_12 {dimension_numbers = #tpu.dot_dimension_numbers<[1], [0], [0], [1], [0, 0, 1, 1], [], []>} : vector<8x128xf32>, vector<128x128xf32>, vector<8x128xf32> -> vector<8x128xf32>
    %18 = vector.broadcast %6 : vector<1x128xf32> to vector<8x128xf32>
    %19 = arith.addf %17, %18 : vector<8x128xf32>
    %20 = tpu.iota {dimensions = array<i32: 1>} : vector<8x128xi32>
    %c4_i32 = arith.constant 4 : i32
    %21 = vector.broadcast %c4_i32 : i32 to vector<8x128xi32>
    %22 = arith.cmpi slt, %20, %21 : vector<8x128xi32>
    %cst_13 = arith.constant 0xFF800000 : f32
    %23 = vector.broadcast %cst_13 : f32 to vector<8x128xf32>
    %24 = arith.select %22, %19, %23 : vector<8x128xi1>, vector<8x128xf32>
    %cst_14 = arith.constant dense<0xFF800000> : vector<8xf32>
    %25 = vector.multi_reduction <maximumf>, %24, %cst_14 [1] : vector<8x128xf32> to vector<8xf32>
    %26 = vector.shape_cast %25 : vector<8xf32> to vector<8x1xf32>
    %27 = vector.broadcast %26 : vector<8x1xf32> to vector<8x128xf32>
    %28 = arith.subf %24, %27 : vector<8x128xf32>
    %29 = math.exp %28 : vector<8x128xf32>
    %cst_15 = arith.constant dense<0.000000e+00> : vector<8xf32>
    %30 = vector.multi_reduction <add>, %29, %cst_15 [1] : vector<8x128xf32> to vector<8xf32>
    %31 = vector.shape_cast %30 : vector<8xf32> to vector<8x1xf32>
    %32 = tpu.reciprocal %31 {approx = true} : vector<8x1xf32> -> vector<8x1xf32>
    %33 = arith.mulf %31, %32 : vector<8x1xf32>
    %cst_16 = arith.constant 2.000000e+00 : f32
    %34 = vector.broadcast %cst_16 : f32 to vector<8x1xf32>
    %35 = arith.subf %34, %33 : vector<8x1xf32>
    %36 = arith.mulf %32, %35 : vector<8x1xf32>
    %37 = vector.broadcast %36 : vector<8x1xf32> to vector<8x128xf32>
    %38 = arith.mulf %29, %37 : vector<8x128xf32>
    %39 = arith.select %22, %38, %19 : vector<8x128xi1>, vector<8x128xf32>
    %40 = vector.extract_strided_slice %39 {offsets = [0, 0], sizes = [8, 8], strides = [1, 1]} : vector<8x128xf32> to vector<8x8xf32>
    %c0_17 = arith.constant 0 : index
    %c0_18 = arith.constant 0 : index
    %41 = vector.load %arg4[%c0_17, %c0_18] : memref<8x8xf32, #tpu.memory_space<vmem>>, vector<8x8xf32>
    tpu.vector_store %arg4[%c0_17, %c0_18], %40 {strides = array<i32>} : memref<8x8xf32, #tpu.memory_space<vmem>>, vector<8x8xf32>,
    return
  }
  func.func @transform_0(%arg0: i32) -> (i32, i32) {
    %c0_i32 = arith.constant 0 : i32
    %c0_i32_0 = arith.constant 0 : i32
    return %arg0, %c0_i32 : i32, i32
  }
  func.func @transform_1(%arg0: i32) -> (i32, i32) {
    %c0_i32 = arith.constant 0 : i32
    %c0_i32_0 = arith.constant 0 : i32
    %c0_i32_1 = arith.constant 0 : i32
    return %c0_i32, %c0_i32_0 : i32, i32
  }
  func.func @transform_2(%arg0: i32) -> (i32, i32) {
    %c0_i32 = arith.constant 0 : i32
    %c0_i32_0 = arith.constant 0 : i32
    %c0_i32_1 = arith.constant 0 : i32
    return %c0_i32, %c0_i32_0 : i32, i32
  }
  func.func @transform_3(%arg0: i32) -> (i32, i32) {
    %c0_i32 = arith.constant 0 : i32
    %c0_i32_0 = arith.constant 0 : i32
    return %arg0, %c0_i32 : i32, i32
  }
}

</mosaic_0001>

<llo_original>
// kernel: tpu_custom_call.1
$region0: #{tpu_custom_call.1}
  #allocation0 [shape = 'u32[]', space=smem, size = 0x4, offset = 0x4, fixed_abs, tag = 'smem constant byte address 0x4 - core index']
  #allocation1 [shape = 'u32[144,128]{1,0:T(1,128)}', space=vmem, size = 0x12000, scoped, tag = 'internal scratch']
  %s0 = inlined_call_operand.hbm [shape: f32[8,16], index: 0, kind: input, shape index: {}]
  %s1 = inlined_call_operand.hbm [shape: f32[272,128], index: 1, kind: input, shape index: {}]
  %s2 = inlined_call_operand.vmem [shape: f32[3,128], index: 2, kind: input, shape index: {}]
  %s3 = inlined_call_operand.hbm [shape: f32[8,8], index: 3, kind: output, shape index: {}]
  %s4 = sld [smem:[#allocation0]]
  $region30: #{tpu_custom_call.1} parent=0
    _
  %s6 = ssub.s32 1, %s4
  %s7 = scalar_select 0, %s6, %s4
  $region1: #{tpu_custom_call.1} parent=0
    #allocation2 [shape = 'u8[4096]{0}', space=vmem, size = 0x1000, scoped, tag = 'input window, operand 0, single buffered']
    #allocation3 [shape = 's32[1]{0}', space=sflag, size = 0x4, scoped, tag = 'scoped memory for tpu_custom_call.1']
    #allocation4 [shape = 's32[1]{0}', space=sflag, size = 0x4, scoped, tag = 'scoped memory for tpu_custom_call.1']
    #allocation5 [shape = 'u8[139264]{0}', space=vmem, size = 0x22000, scoped, tag = 'input window, operand 1, single buffered']
    #allocation6 [shape = 's32[1]{0}', space=sflag, size = 0x4, scoped, tag = 'scoped memory for tpu_custom_call.1']
    #allocation7 [shape = 'u8[4096]{0}', space=vmem, size = 0x1000, scoped, tag = 'output window, operand 0, single buffered']
    %8 = vsyncpa [#allocation3], 0
    %9 = vsyncpa [#allocation6], 0
    %10 = vsyncpa [#allocation4], 0
    // Predicated region
    $region2: #{tpu_custom_call.1} parent=1 // pred_check
      _
    $region3: #{tpu_custom_call.1} parent=1 // pred_check_branch
      %12 = sbr.rel (0) target = $region5
    $region4: #{tpu_custom_call.1} parent=1 // pred_region
      %s14 = ssub.s32 128, 128
      %15 = vsyncadd [#allocation3], %s14
      %s17 = sshll.u32 [#allocation2], 4
      %s18 = int_to_ptr.vmem [resolvable:$true] %s17
      %20 = dma.hbm_to_vmem [thread:$0]  %s0, 128, %s18, [#allocation3]
    $region5: #{tpu_custom_call.1} parent=1 // pred_fallthru
      _
    // Predicated region
    $region6: #{tpu_custom_call.1} parent=1 // pred_check
      _
    $region7: #{tpu_custom_call.1} parent=1 // pred_check_branch
      %22 = sbr.rel (0) target = $region9
    $region8: #{tpu_custom_call.1} parent=1 // pred_region
      %s24 = ssub.s32 4352, 4352
      %25 = vsyncadd [#allocation6], %s24
      %s26 = sshll.u32 [#allocation5], 4
      %s27 = int_to_ptr.vmem [resolvable:$true] %s26
      %32 = dma.hbm_to_vmem [thread:$0]  %s1, 4352, %s27, [#allocation6], 128, 128, 8
    $region9: #{tpu_custom_call.1} parent=1 // pred_fallthru
      _
    // Predicated region
    $region10: #{tpu_custom_call.1} parent=1 // pred_check
      _
    $region11: #{tpu_custom_call.1} parent=1 // pred_check_branch
      %34 = sbr.rel (0) target = $region13
    $region12: #{tpu_custom_call.1} parent=1 // pred_region
      _
    $region13: #{tpu_custom_call.1} parent=1 // pred_fallthru
      _
    // Predicated region
    $region14: #{tpu_custom_call.1} parent=1 // pred_check
      _
    $region15: #{tpu_custom_call.1} parent=1 // pred_check_branch
      %36 = sbr.rel (0) target = $region17
    $region16: #{tpu_custom_call.1} parent=1 // pred_region
      %37 = dma.done [#allocation3], 128
    $region17: #{tpu_custom_call.1} parent=1 // pred_fallthru
      _
    // Predicated region
    $region18: #{tpu_custom_call.1} parent=1 // pred_check
      _
    $region19: #{tpu_custom_call.1} parent=1 // pred_check_branch
      %39 = sbr.rel (0) target = $region21
    $region20: #{tpu_custom_call.1} parent=1 // pred_region
      %40 = dma.done [#allocation6], 4352
    $region21: #{tpu_custom_call.1} parent=1 // pred_fallthru
      _
    %v41 = vld [vmem:[#allocation2] sm:$0xff]
    %v42 = vld [vmem:[#allocation5] sm:$0xff]
    %v43 = vld [vmem:[#allocation5 + $0x8] sm:$0xff]
    %v44 = vld [vmem:[#allocation5 + $0x10] sm:$0xff]
    %v45 = vld [vmem:[#allocation5 + $0x18] sm:$0xff]
    %v46 = vld [vmem:[#allocation5 + $0x20] sm:$0xff]
    %v47 = vld [vmem:[#allocation5 + $0x28] sm:$0xff]
    %v48 = vld [vmem:[#allocation5 + $0x30] sm:$0xff]
    %v49 = vld [vmem:[#allocation5 + $0x38] sm:$0xff]
    %v50 = vld [vmem:[#allocation5 + $0x40] sm:$0xff]
    %v51 = vld [vmem:[#allocation5 + $0x48] sm:$0xff]
    %v52 = vld [vmem:[#allocation5 + $0x50] sm:$0xff]
    %v53 = vld [vmem:[#allocation5 + $0x58] sm:$0xff]
    %v54 = vld [vmem:[#allocation5 + $0x60] sm:$0xff]
    %v55 = vld [vmem:[#allocation5 + $0x68] sm:$0xff]
    %v56 = vld [vmem:[#allocation5 + $0x70] sm:$0xff]
    %v57 = vld [vmem:[#allocation5 + $0x78] sm:$0xff]
    %v58 = vld [vmem:[#allocation5 + $0x80] sm:$0xff]
    %v59 = vld [vmem:[#allocation5 + $0x88] sm:$0xff]
    %v60 = vld [vmem:[#allocation5 + $0x90] sm:$0xff]
    %v61 = vld [vmem:[#allocation5 + $0x98] sm:$0xff]
    %v62 = vld [vmem:[#allocation5 + $0xa0] sm:$0xff]
    %v63 = vld [vmem:[#allocation5 + $0xa8] sm:$0xff]
    %v64 = vld [vmem:[#allocation5 + $0xb0] sm:$0xff]
    %v65 = vld [vmem:[#allocation5 + $0xb8] sm:$0xff]
    %v66 = vld [vmem:[#allocation5 + $0xc0] sm:$0xff]
    %v67 = vld [vmem:[#allocation5 + $0xc8] sm:$0xff]
    %v68 = vld [vmem:[#allocation5 + $0xd0] sm:$0xff]
    %v69 = vld [vmem:[#allocation5 + $0xd8] sm:$0xff]
    %v70 = vld [vmem:[#allocation5 + $0xe0] sm:$0xff]
    %v71 = vld [vmem:[#allocation5 + $0xe8] sm:$0xff]
    %v72 = vld [vmem:[#allocation5 + $0xf0] sm:$0xff]
    %v73 = vld [vmem:[#allocation5 + $0xf8] sm:$0xff]
    %v74 = vld [vmem:[#allocation5 + $0x100] sm:$0xff]
    %v75 = vld [vmem:[#allocation5 + $0x108] sm:$0xff]
    %v76 = vld [vmem:[%s2] sm:$0x1]
    %v77 = vld [vmem:[%s2 + $0x1] sm:$0x1]
    %v78 = vld [vmem:[%s2 + $0x2] sm:$0x1]
    %v79 = vlaneseq
    %v80 = vshrl.u32 %v79, 7
    %v81 = vsub.s32 0, %v80
    %v82 = vrot.slane %v76, %v81
    %vm83 = vcmask 130048
    %v85 = vsel %vm83, %v41, 0
    %87 = vmatprep.subr.mxu0 0.0
    %88 = vmatpush1.msra.mxu0 %v42
    %89 = vmatprep.subr.mxu0 0.0
    %90 = vmatpush1.msra.mxu0 %v43
    %91 = vmatprep.subr.mxu0 0.0
    %92 = vmatpush1.msra.mxu0 0.0
    %93 = vmatprep.subr.mxu0 0.0
    %94 = vmatpush1.msra.mxu0 0.0
    %95 = vmatprep.subr.mxu0 0.0
    %96 = vmatpush1.msra.mxu0 0.0
    %97 = vmatprep.subr.mxu0 0.0
    %98 = vmatpush1.msra.mxu0 0.0
    %99 = vmatprep.subr.mxu0 0.0
    %100 = vmatpush1.msra.mxu0 0.0
    %101 = vmatprep.subr.mxu0 0.0
    %102 = vmatpush1.msra.mxu0 0.0
    %103 = vmatprep.subr.mxu0 0.0
    %104 = vmatpush1.msra.mxu0 0.0
    %105 = vmatprep.subr.mxu0 0.0
    %106 = vmatpush1.msra.mxu0 0.0
    %107 = vmatprep.subr.mxu0 0.0
    %108 = vmatpush1.msra.mxu0 0.0
    %109 = vmatprep.subr.mxu0 0.0
    %110 = vmatpush1.msra.mxu0 0.0
    %111 = vmatprep.subr.mxu0 0.0
    %112 = vmatpush1.msra.mxu0 0.0
    %113 = vmatprep.subr.mxu0 0.0
    %114 = vmatpush1.msra.mxu0 0.0
    %115 = vmatprep.subr.mxu0 0.0
    %116 = vmatpush1.msra.mxu0 0.0
    %117 = vmatprep.subr.mxu0 0.0
    %118 = vmatpush1.msra.mxu0 0.0
    %119 = vmatprep.subr.mxu0 0.0
    %120 = vmatpush1.msra.mxu0 0.0
    %121 = vmatprep.subr.mxu0 0.0
    %122 = vmatpush1.msra.mxu0 0.0
    %123 = vmatprep.subr.mxu0 0.0
    %124 = vmatpush1.msra.mxu0 0.0
    %125 = vmatprep.subr.mxu0 0.0
    %126 = vmatpush1.msra.mxu0 0.0
    %127 = vmatprep.subr.mxu0 0.0
    %128 = vmatpush1.msra.mxu0 0.0
    %129 = vmatprep.subr.mxu0 0.0
    %130 = vmatpush1.msra.mxu0 0.0
    %131 = vmatprep.subr.mxu0 0.0
    %132 = vmatpush1.msra.mxu0 0.0
    %133 = vmatprep.subr.mxu0 0.0
    %134 = vmatpush1.msra.mxu0 0.0
    %135 = vmatprep.subr.mxu0 0.0
    %136 = vmatpush1.msra.mxu0 0.0
    %137 = vmatprep.subr.mxu0 0.0
    %138 = vmatpush1.msra.mxu0 0.0
    %139 = vmatprep.subr.mxu0 0.0
    %140 = vmatpush1.msra.mxu0 0.0
    %141 = vmatprep.subr.mxu0 0.0
    %142 = vmatpush1.msra.mxu0 0.0
    %143 = vmatprep.subr.mxu0 0.0
    %144 = vmatpush1.msra.mxu0 0.0
    %145 = vmatprep.subr.mxu0 0.0
    %146 = vmatpush1.msra.mxu0 0.0
    %147 = vmatprep.subr.mxu0 0.0
    %148 = vmatpush1.msra.mxu0 0.0
    %149 = vmatprep.subr.mxu0 0.0
    %150 = vmatpush1.msra.mxu0 0.0
    %151 = vmatprep.mubr.f32.mxu0 0.0
    %152 = vmatmul.mubr.f32.gmra.mrb[0].mxu0 %v85
    %v153 = vpop.f32.mrb[0].mxu0
    %v154 = vadd.f32 %v82, %v153
    %v155 = vpop.f32.mrb[0].mxu0
    %156 = vdwg.mxu0
    %v157 = vmax.f32 %v154, 0.0
    %v158 = vlaneseq
    %v159 = vshrl.u32 %v158, 7
    %v160 = vsub.s32 0, %v159
    %v161 = vrot.slane %v77, %v160
    %162 = vmatprep.subr.mxu0 0.0
    %163 = vmatpush1.msra.mxu0 %v44
    %164 = vmatprep.subr.mxu0 0.0
    %165 = vmatpush1.msra.mxu0 %v45
    %166 = vmatprep.subr.mxu0 0.0
    %167 = vmatpush1.msra.mxu0 %v46
    %168 = vmatprep.subr.mxu0 0.0
    %169 = vmatpush1.msra.mxu0 %v47
    %170 = vmatprep.subr.mxu0 0.0
    %171 = vmatpush1.msra.mxu0 %v48
    %172 = vmatprep.subr.mxu0 0.0
    %173 = vmatpush1.msra.mxu0 %v49
    %174 = vmatprep.subr.mxu0 0.0
    %175 = vmatpush1.msra.mxu0 %v50
    %176 = vmatprep.subr.mxu0 0.0
    %177 = vmatpush1.msra.mxu0 %v51
    %178 = vmatprep.subr.mxu0 0.0
    %179 = vmatpush1.msra.mxu0 %v52
    %180 = vmatprep.subr.mxu0 0.0
    %181 = vmatpush1.msra.mxu0 %v53
    %182 = vmatprep.subr.mxu0 0.0
    %183 = vmatpush1.msra.mxu0 %v54
    %184 = vmatprep.subr.mxu0 0.0
    %185 = vmatpush1.msra.mxu0 %v55
    %186 = vmatprep.subr.mxu0 0.0
    %187 = vmatpush1.msra.mxu0 %v56
    %188 = vmatprep.subr.mxu0 0.0
    %189 = vmatpush1.msra.mxu0 %v57
    %190 = vmatprep.subr.mxu0 0.0
    %191 = vmatpush1.msra.mxu0 %v58
    %192 = vmatprep.subr.mxu0 0.0
    %193 = vmatpush1.msra.mxu0 %v59
    %194 = vmatprep.subr.mxu0 0.0
    %195 = vmatpush1.msra.mxu0 0.0
    %196 = vmatprep.subr.mxu0 0.0
    %197 = vmatpush1.msra.mxu0 0.0
    %198 = vmatprep.subr.mxu0 0.0
    %199 = vmatpush1.msra.mxu0 0.0
    %200 = vmatprep.subr.mxu0 0.0
    %201 = vmatpush1.msra.mxu0 0.0
    %202 = vmatprep.subr.mxu0 0.0
    %203 = vmatpush1.msra.mxu0 0.0
    %204 = vmatprep.subr.mxu0 0.0
    %205 = vmatpush1.msra.mxu0 0.0
    %206 = vmatprep.subr.mxu0 0.0
    %207 = vmatpush1.msra.mxu0 0.0
    %208 = vmatprep.subr.mxu0 0.0
    %209 = vmatpush1.msra.mxu0 0.0
    %210 = vmatprep.subr.mxu0 0.0
    %211 = vmatpush1.msra.mxu0 0.0
    %212 = vmatprep.subr.mxu0 0.0
    %213 = vmatpush1.msra.mxu0 0.0
    %214 = vmatprep.subr.mxu0 0.0
    %215 = vmatpush1.msra.mxu0 0.0
    %216 = vmatprep.subr.mxu0 0.0
    %217 = vmatpush1.msra.mxu0 0.0
    %218 = vmatprep.subr.mxu0 0.0
    %219 = vmatpush1.msra.mxu0 0.0
    %220 = vmatprep.subr.mxu0 0.0
    %221 = vmatpush1.msra.mxu0 0.0
    %222 = vmatprep.subr.mxu0 0.0
    %223 = vmatpush1.msra.mxu0 0.0
    %224 = vmatprep.subr.mxu0 0.0
    %225 = vmatpush1.msra.mxu0 0.0
    %226 = vmatprep.mubr.f32.mxu0 0.0
    %227 = vmatmul.mubr.f32.gmra.mrb[0].mxu0 %v157
    %v228 = vpop.f32.mrb[0].mxu0
    %v229 = vadd.f32 %v161, %v228
    %v230 = vpop.f32.mrb[0].mxu0
    %231 = vdwg.mxu0
    %v232 = vmax.f32 %v229, 0.0
    %v233 = vlaneseq
    %v234 = vshrl.u32 %v233, 7
    %v235 = vsub.s32 0, %v234
    %v236 = vrot.slane %v78, %v235
    %237 = vmatprep.subr.mxu0 0.0
    %238 = vmatpush1.msra.mxu0 %v60
    %239 = vmatprep.subr.mxu0 0.0
    %240 = vmatpush1.msra.mxu0 %v61
    %241 = vmatprep.subr.mxu0 0.0
    %242 = vmatpush1.msra.mxu0 %v62
    %243 = vmatprep.subr.mxu0 0.0
    %244 = vmatpush1.msra.mxu0 %v63
    %245 = vmatprep.subr.mxu0 0.0
    %246 = vmatpush1.msra.mxu0 %v64
    %247 = vmatprep.subr.mxu0 0.0
    %248 = vmatpush1.msra.mxu0 %v65
    %249 = vmatprep.subr.mxu0 0.0
    %250 = vmatpush1.msra.mxu0 %v66
    %251 = vmatprep.subr.mxu0 0.0
    %252 = vmatpush1.msra.mxu0 %v67
    %253 = vmatprep.subr.mxu0 0.0
    %254 = vmatpush1.msra.mxu0 %v68
    %255 = vmatprep.subr.mxu0 0.0
    %256 = vmatpush1.msra.mxu0 %v69
    %257 = vmatprep.subr.mxu0 0.0
    %258 = vmatpush1.msra.mxu0 %v70
    %259 = vmatprep.subr.mxu0 0.0
    %260 = vmatpush1.msra.mxu0 %v71
    %261 = vmatprep.subr.mxu0 0.0
    %262 = vmatpush1.msra.mxu0 %v72
    %263 = vmatprep.subr.mxu0 0.0
    %264 = vmatpush1.msra.mxu0 %v73
    %265 = vmatprep.subr.mxu0 0.0
    %266 = vmatpush1.msra.mxu0 %v74
    %267 = vmatprep.subr.mxu0 0.0
    %268 = vmatpush1.msra.mxu0 %v75
    %269 = vmatprep.subr.mxu0 0.0
    %270 = vmatpush1.msra.mxu0 0.0
    %271 = vmatprep.subr.mxu0 0.0
    %272 = vmatpush1.msra.mxu0 0.0
    %273 = vmatprep.subr.mxu0 0.0
    %274 = vmatpush1.msra.mxu0 0.0
    %275 = vmatprep.subr.mxu0 0.0
    %276 = vmatpush1.msra.mxu0 0.0
    %277 = vmatprep.subr.mxu0 0.0
    %278 = vmatpush1.msra.mxu0 0.0
    %279 = vmatprep.subr.mxu0 0.0
    %280 = vmatpush1.msra.mxu0 0.0
    %281 = vmatprep.subr.mxu0 0.0
    %282 = vmatpush1.msra.mxu0 0.0
    %283 = vmatprep.subr.mxu0 0.0
    %284 = vmatpush1.msra.mxu0 0.0
    %285 = vmatprep.subr.mxu0 0.0
    %286 = vmatpush1.msra.mxu0 0.0
    %287 = vmatprep.subr.mxu0 0.0
    %288 = vmatpush1.msra.mxu0 0.0
    %289 = vmatprep.subr.mxu0 0.0
    %290 = vmatpush1.msra.mxu0 0.0
    %291 = vmatprep.subr.mxu0 0.0
    %292 = vmatpush1.msra.mxu0 0.0
    %293 = vmatprep.subr.mxu0 0.0
    %294 = vmatpush1.msra.mxu0 0.0
    %295 = vmatprep.subr.mxu0 0.0
    %296 = vmatpush1.msra.mxu0 0.0
    %297 = vmatprep.subr.mxu0 0.0
    %298 = vmatpush1.msra.mxu0 0.0
    %299 = vmatprep.subr.mxu0 0.0
    %300 = vmatpush1.msra.mxu0 0.0
    %301 = vmatprep.mubr.f32.mxu0 0.0
    %302 = vmatmul.mubr.f32.gmra.mrb[0].mxu0 %v232
    %v303 = vpop.f32.mrb[0].mxu0
    %v304 = vadd.f32 %v236, %v303
    %v305 = vpop.f32.mrb[0].mxu0
    %306 = vdwg.mxu0
    %v307 = vlaneseq
    %v308 = vand.u32 %v307, 127
    %vm309 = vcmp.lt.s32.totalorder %v308, 4
    %v310 = vsel %vm309, %v304, -inf
    %311 = vmax.xlane.f32.xlu0 %v310
    %v312 = vpop.xlane.xlu0 %311
    %v313 = vsub.f32 %v310, %v312
    %v314 = vmul.f32 %v313, 1.442695
    %v315 = vpow.pop %v314
    %316 = vadd.xlane.f32.xlu0 %v315
    %v317 = vpop.xlane.xlu0 %316
    %v318 = vrcp.pop %v317
    %v319 = vmul.f32 %v317, %v318
    %v320 = vsub.f32 2.0, %v319
    %v321 = vmul.f32 %v318, %v320
    %v322 = vmul.f32 %v315, %v321
    %v323 = vsel %vm309, %v322, %v304
    %vm324 = vcmask 64512
    %325 = vst.msk [vmem:[#allocation7] sm:$0xff] %vm324, %v323
    // Predicated region
    $region22: #{tpu_custom_call.1} parent=1 // pred_check
      _
    $region23: #{tpu_custom_call.1} parent=1 // pred_check_branch
      %327 = sbr.rel (0) target = $region25
    $region24: #{tpu_custom_call.1} parent=1 // pred_region
      %s329 = ssub.s32 128, 128
      %330 = vsyncadd [#allocation4], %s329
      %s332 = sshll.u32 [#allocation7], 4
      %s333 = int_to_ptr.vmem [resolvable:$true] %s332
      %335 = dma.vmem_to_hbm [thread:$0]  %s333, 128, %s3, [#allocation4]
    $region25: #{tpu_custom_call.1} parent=1 // pred_fallthru
      _
    // Predicated region
    $region26: #{tpu_custom_call.1} parent=1 // pred_check
      _
    $region27: #{tpu_custom_call.1} parent=1 // pred_check_branch
      %337 = sbr.rel (0) target = $region29
    $region28: #{tpu_custom_call.1} parent=1 // pred_region
      %338 = dma.done [#allocation4], 128
    $region29: #{tpu_custom_call.1} parent=1 // pred_fallthru
      _
    %339 = vsyncpa [#allocation3], 1
    %340 = vsyncpa [#allocation6], 1
    %341 = vsyncpa [#allocation4], 1

</llo_original>
